<compile_context>
chip_gen: v5e
topology: v5e:2x2
jax: 0.10.0
libtpu: 0.0.40
codegen_flags: <defaults>
</compile_context>

<pallas_src>
import jax
import jax.numpy as jnp
from jax.experimental import pallas as pl
from jax.experimental.pallas import tpu as pltpu

H_DIM = 128
NEG_SLOPE = 0.2
LANE = 128
MAX_TILE_B = 1024          # upper bound on batch-tile rows (VMEM footprint stays < ~1.5 MiB)
SINGLE_STEP_MAX_B = 512    # up to this batch, one grid step (per-step overhead dominates)


def _leaky_relu(x, slope=NEG_SLOPE):
    return jnp.where(x >= 0, x, slope * x)


def _round_up(n, m):
    return ((n + m - 1) // m) * m


def _choose_tile_b(B):
    """Batch tile: whole (8-aligned) batch when small; >=2 grid steps when large (v7x 2 TCs)."""
    bp8 = _round_up(max(B, 1), 8)
    if bp8 <= SINGLE_STEP_MAX_B:
        return bp8
    half = _round_up((bp8 + 1) // 2, 8)
    return min(MAX_TILE_B, half)


def dqn_mlp_kernel(x_ref, w1_ref, b1_ref, w2_ref, b2_ref, w3_ref, b3_ref, o_ref):
    """Fused 3-layer MLP tile: (x@W1+b1)->LeakyReLU->(.@W2+b2)->LeakyReLU->(.@W3+b3).

    x arrives f32 and is cast to bf16 in-kernel (MXU operand); accumulation, bias adds and
    LeakyReLU run in f32.  W3/b3 are lane-padded to 128 for the MXU; only the true out_dim
    columns are stored (unpadded HBM write).
    """
    x = x_ref[...].astype(jnp.bfloat16)

    h1 = jnp.dot(x, w1_ref[...], preferred_element_type=jnp.float32) + b1_ref[...]
    h1 = _leaky_relu(h1).astype(jnp.bfloat16)

    h2 = jnp.dot(h1, w2_ref[...], preferred_element_type=jnp.float32) + b2_ref[...]
    h2 = _leaky_relu(h2).astype(jnp.bfloat16)

    h3 = jnp.dot(h2, w3_ref[...], preferred_element_type=jnp.float32) + b3_ref[...]
    o_ref[...] = h3[:, : o_ref.shape[-1]].astype(o_ref.dtype)


def prepare_params(params):
    """One-time (init / target-update time) cast + pad of the weights for the kernel.

    Weights -> bf16; final layer zero-padded to 128 output lanes for the MXU.  Keeps these
    conversions out of the per-forward hot path.
    """
    w1, b1, w2, b2, w3, b3 = params
    h_dim = w1.shape[1]
    out_dim = w3.shape[1]
    out_p = _round_up(out_dim, LANE)

    w1b = w1.astype(jnp.bfloat16)
    w2b = w2.astype(jnp.bfloat16)
    w3b = jnp.pad(w3.astype(jnp.bfloat16), ((0, 0), (0, out_p - out_dim)))
    b3p = jnp.pad(b3.astype(jnp.float32), ((0, 0), (0, out_p - out_dim)))
    prepared = (w1b, b1.astype(jnp.float32), w2b, b2.astype(jnp.float32), w3b, b3p)
    return prepared, out_dim


def dqn_forward(x, prepared, out_dim):
    """DQN q_network forward: x [B, input_dim] f32 -> Q-values [B, out_dim] f32."""
    w1b, b1, w2b, b2, w3b, b3p = prepared
    B, in_dim = x.shape
    h_dim = w1b.shape[1]
    out_p = w3b.shape[1]

    tile_b = _choose_tile_b(B)
    Bp = _round_up(B, tile_b)
    if Bp != B:
        x = jnp.pad(x, ((0, Bp - B), (0, 0)))

    grid = (Bp // tile_b,)

    # Constant-index (resident) blocks: single pipeline buffer is enough.
    def resident(shape):
        return pl.BlockSpec(shape, lambda i: (0, 0), pipeline_mode=pl.Buffered(1))

    flops = 2 * Bp * (in_dim * h_dim + h_dim * h_dim + h_dim * out_p)
    bytes_accessed = (
        Bp * in_dim * 4                                                 # x (f32 read)
        + (in_dim * h_dim + h_dim * h_dim + h_dim * out_p) * 2          # bf16 weights
        + (2 * h_dim + out_p) * 4                                       # f32 biases
        + Bp * out_dim * 4                                              # unpadded f32 output
    )

    out = pl.pallas_call(
        dqn_mlp_kernel,
        out_shape=jax.ShapeDtypeStruct((Bp, out_dim), jnp.float32),
        grid=grid,
        in_specs=[
            pl.BlockSpec((tile_b, in_dim), lambda i: (i, 0)),   # x: tiled over batch
            resident(w1b.shape), resident(b1.shape),
            resident(w2b.shape), resident(b2.shape),
            resident(w3b.shape), resident(b3p.shape),
        ],
        out_specs=pl.BlockSpec((tile_b, out_dim), lambda i: (i, 0)),
        compiler_params=pltpu.CompilerParams(
            dimension_semantics=("parallel",)),
        cost_estimate=pl.CostEstimate(
            flops=flops, transcendentals=0, bytes_accessed=bytes_accessed),
    )(x, w1b, b1, w2b, b2, w3b, b3p)

    return out[:B] if Bp != B else out


def init_dqn_params(key, input_dim, output_dim, h_dim=H_DIM):
    """PyTorch-style (uniform +/- 1/sqrt(fan_in)) init.

    Weights stored as [in, out] (transposed vs nn.Linear) so the kernel computes x @ W.
    Biases kept 2D ([1, out]) for TPU layout.
    """
    def linear(k, fan_in, fan_out):
        kw, kb = jax.random.split(k)
        bound = 1.0 / jnp.sqrt(float(fan_in))
        w = jax.random.uniform(kw, (fan_in, fan_out), jnp.float32, -bound, bound)
        b = jax.random.uniform(kb, (1, fan_out), jnp.float32, -bound, bound)
        return w, b

    k1, k2, k3 = jax.random.split(key, 3)
    w1, b1 = linear(k1, input_dim, h_dim)
    w2, b2 = linear(k2, h_dim, h_dim)
    w3, b3 = linear(k3, h_dim, output_dim)
    return (w1, b1, w2, b2, w3, b3)


def reference_forward(x, params, bf16_operands=True):
    """Plain-JAX reference; bf16_operands=True mirrors the kernel's MXU operand casting."""
    w1, b1, w2, b2, w3, b3 = params
    c = (lambda a: a.astype(jnp.bfloat16)) if bf16_operands else (lambda a: a)
    h = _leaky_relu(jnp.dot(c(x), c(w1), preferred_element_type=jnp.float32) + b1)
    h = _leaky_relu(jnp.dot(c(h), c(w2), preferred_element_type=jnp.float32) + b2)
    return jnp.dot(c(h), c(w3), preferred_element_type=jnp.float32) + b3


if __name__ == "__main__":
    key = jax.random.PRNGKey(0)
    k_param, k_x, k_x2, k_x3 = jax.random.split(key, 4)

    input_dim = 16   # small observation vector
    output_dim = 8   # number of discrete actions

    params = init_dqn_params(k_param, input_dim, output_dim)
    prepared, out_dim = prepare_params(params)   # one-time cast/pad (not per forward)

    # Small batch: single grid step, no batch padding.
    x = jax.random.normal(k_x, (8, input_dim), jnp.float32)
    q_values = jax.block_until_ready(dqn_forward(x, prepared, out_dim))
    assert q_values.shape == (8, output_dim)
    ref_bf16 = reference_forward(x, params, bf16_operands=True)
    assert jnp.allclose(q_values, ref_bf16, atol=1e-3, rtol=1e-3), "mismatch vs bf16 reference"
    ref_f32 = reference_forward(x, params, bf16_operands=False)
    assert jnp.allclose(q_values, ref_f32, atol=5e-2, rtol=5e-2), "mismatch vs f32 reference"

    # Non-8-aligned batch: exercises the jnp.pad path (padded rows sliced off).
    x_odd = jax.random.normal(k_x3, (5, input_dim), jnp.float32)
    q_odd = jax.block_until_ready(dqn_forward(x_odd, prepared, out_dim))
    assert q_odd.shape == (5, output_dim)
    assert jnp.allclose(q_odd, reference_forward(x_odd, params, True), atol=1e-3, rtol=1e-3), \
        "mismatch on padded batch"

    # Larger batch: tile_b=640, grid=(2,) -> pipelined multi-step grid, both v7x TCs usable.
    x_big = jax.random.normal(k_x2, (1280, input_dim), jnp.float32)
    q_big = jax.block_until_ready(dqn_forward(x_big, prepared, out_dim))
    assert q_big.shape == (1280, output_dim)
    assert jnp.allclose(q_big, reference_forward(x_big, params, True), atol=1e-3, rtol=1e-3), \
        "mismatch on large batch"

    print("KERNEL_OK")
</pallas_src>

<mosaic_0001>
module attributes {stable_mosaic.version = 11 : i64} {
  func.func @dqn_mlp_kernel(%arg0: i32, %arg1: memref<8x16xf32, #tpu.memory_space<vmem>>, %arg2: memref<16x128xbf16, #tpu.memory_space<vmem>>, %arg3: memref<1x128xf32, #tpu.memory_space<vmem>>, %arg4: memref<128x128xbf16, #tpu.memory_space<vmem>>, %arg5: memref<1x128xf32, #tpu.memory_space<vmem>>, %arg6: memref<128x128xbf16, #tpu.memory_space<vmem>>, %arg7: memref<1x128xf32, #tpu.memory_space<vmem>>, %arg8: memref<8x8xf32, #tpu.memory_space<vmem>>) attributes {dimension_semantics = [#tpu.dimension_semantics<parallel>], iteration_bounds = array<i64: 1>, scalar_prefetch = 0 : i64, scratch_operands = 0 : i64, tpu.core_type = #tpu.core_type<tc>, window_params = [{transform_indices = @transform_0, window_bounds = array<i64: 8, 16>}, {pipeline_mode = #tpu.pipeline_mode<synchronous>, transform_indices = @transform_1, window_bounds = array<i64: 16, 128>}, {pipeline_mode = #tpu.pipeline_mode<synchronous>, transform_indices = @transform_2, window_bounds = array<i64: 1, 128>}, {pipeline_mode = #tpu.pipeline_mode<synchronous>, transform_indices = @transform_3, window_bounds = array<i64: 128, 128>}, {pipeline_mode = #tpu.pipeline_mode<synchronous>, transform_indices = @transform_4, window_bounds = array<i64: 1, 128>}, {pipeline_mode = #tpu.pipeline_mode<synchronous>, transform_indices = @transform_5, window_bounds = array<i64: 128, 128>}, {pipeline_mode = #tpu.pipeline_mode<synchronous>, transform_indices = @transform_6, window_bounds = array<i64: 1, 128>}, {transform_indices = @transform_7, window_bounds = array<i64: 8, 8>}]} {
    %c0 = arith.constant 0 : index
    %c0_0 = arith.constant 0 : index
    %0 = vector.load %arg1[%c0, %c0_0] : memref<8x16xf32, #tpu.memory_space<vmem>>, vector<8x16xf32>
    %1 = arith.truncf %0 : vector<8x16xf32> to vector<8x16xbf16>
    %c0_1 = arith.constant 0 : index
    %c0_2 = arith.constant 0 : index
    %2 = vector.load %arg2[%c0_1, %c0_2] : memref<16x128xbf16, #tpu.memory_space<vmem>>, vector<16x128xbf16>
    %cst = arith.constant dense<0.000000e+00> : vector<8x128xf32>
    %3 = tpu.matmul %1, %2, %cst {dimension_numbers = #tpu.dot_dimension_numbers<[1], [0], [0], [1], [0, 0, 1, 1], [], []>} : vector<8x16xbf16>, vector<16x128xbf16>, vector<8x128xf32> -> vector<8x128xf32>
    %c0_3 = arith.constant 0 : index
    %c0_4 = arith.constant 0 : index
    %4 = vector.load %arg3[%c0_3, %c0_4] : memref<1x128xf32, #tpu.memory_space<vmem>>, vector<1x128xf32>
    %5 = vector.broadcast %4 : vector<1x128xf32> to vector<8x128xf32>
    %6 = arith.addf %3, %5 : vector<8x128xf32>
    %cst_5 = arith.constant 0.000000e+00 : f32
    %7 = vector.broadcast %cst_5 : f32 to vector<8x128xf32>
    %8 = arith.cmpf oge, %6, %7 : vector<8x128xf32>
    %cst_6 = arith.constant 2.000000e-01 : f32
    %9 = vector.broadcast %cst_6 : f32 to vector<8x128xf32>
    %10 = arith.mulf %9, %6 : vector<8x128xf32>
    %11 = arith.select %8, %6, %10 : vector<8x128xi1>, vector<8x128xf32>
    %12 = arith.truncf %11 : vector<8x128xf32> to vector<8x128xbf16>
    %c0_7 = arith.constant 0 : index
    %c0_8 = arith.constant 0 : index
    %13 = vector.load %arg4[%c0_7, %c0_8] : memref<128x128xbf16, #tpu.memory_space<vmem>>, vector<128x128xbf16>
    %cst_9 = arith.constant dense<0.000000e+00> : vector<8x128xf32>
    %14 = tpu.matmul %12, %13, %cst_9 {dimension_numbers = #tpu.dot_dimension_numbers<[1], [0], [0], [1], [0, 0, 1, 1], [], []>} : vector<8x128xbf16>, vector<128x128xbf16>, vector<8x128xf32> -> vector<8x128xf32>
    %c0_10 = arith.constant 0 : index
    %c0_11 = arith.constant 0 : index
    %15 = vector.load %arg5[%c0_10, %c0_11] : memref<1x128xf32, #tpu.memory_space<vmem>>, vector<1x128xf32>
    %16 = vector.broadcast %15 : vector<1x128xf32> to vector<8x128xf32>
    %17 = arith.addf %14, %16 : vector<8x128xf32>
    %cst_12 = arith.constant 0.000000e+00 : f32
    %18 = vector.broadcast %cst_12 : f32 to vector<8x128xf32>
    %19 = arith.cmpf oge, %17, %18 : vector<8x128xf32>
    %cst_13 = arith.constant 2.000000e-01 : f32
    %20 = vector.broadcast %cst_13 : f32 to vector<8x128xf32>
    %21 = arith.mulf %20, %17 : vector<8x128xf32>
    %22 = arith.select %19, %17, %21 : vector<8x128xi1>, vector<8x128xf32>
    %23 = arith.truncf %22 : vector<8x128xf32> to vector<8x128xbf16>
    %c0_14 = arith.constant 0 : index
    %c0_15 = arith.constant 0 : index
    %24 = vector.load %arg6[%c0_14, %c0_15] : memref<128x128xbf16, #tpu.memory_space<vmem>>, vector<128x128xbf16>
    %cst_16 = arith.constant dense<0.000000e+00> : vector<8x128xf32>
    %25 = tpu.matmul %23, %24, %cst_16 {dimension_numbers = #tpu.dot_dimension_numbers<[1], [0], [0], [1], [0, 0, 1, 1], [], []>} : vector<8x128xbf16>, vector<128x128xbf16>, vector<8x128xf32> -> vector<8x128xf32>
    %c0_17 = arith.constant 0 : index
    %c0_18 = arith.constant 0 : index
    %26 = vector.load %arg7[%c0_17, %c0_18] : memref<1x128xf32, #tpu.memory_space<vmem>>, vector<1x128xf32>
    %27 = vector.broadcast %26 : vector<1x128xf32> to vector<8x128xf32>
    %28 = arith.addf %25, %27 : vector<8x128xf32>
    %29 = vector.extract_strided_slice %28 {offsets = [0, 0], sizes = [8, 8], strides = [1, 1]} : vector<8x128xf32> to vector<8x8xf32>
    %c0_19 = arith.constant 0 : index
    %c0_20 = arith.constant 0 : index
    %30 = vector.load %arg8[%c0_19, %c0_20] : memref<8x8xf32, #tpu.memory_space<vmem>>, vector<8x8xf32>
    tpu.vector_store %arg8[%c0_19, %c0_20], %29 {strides = array<i32>} : memref<8x8xf32, #tpu.memory_space<vmem>>, vector<8x8xf32>,
    return
  }
  func.func @transform_0(%arg0: i32) -> (i32, i32) {
    %c0_i32 = arith.constant 0 : i32
    %c0_i32_0 = arith.constant 0 : i32
    return %arg0, %c0_i32 : i32, i32
  }
  func.func @transform_1(%arg0: i32) -> (i32, i32) {
    %c0_i32 = arith.constant 0 : i32
    %c0_i32_0 = arith.constant 0 : i32
    %c0_i32_1 = arith.constant 0 : i32
    return %c0_i32, %c0_i32_0 : i32, i32
  }
  func.func @transform_2(%arg0: i32) -> (i32, i32) {
    %c0_i32 = arith.constant 0 : i32
    %c0_i32_0 = arith.constant 0 : i32
    %c0_i32_1 = arith.constant 0 : i32
    return %c0_i32, %c0_i32_0 : i32, i32
  }
  func.func @transform_3(%arg0: i32) -> (i32, i32) {
    %c0_i32 = arith.constant 0 : i32
    %c0_i32_0 = arith.constant 0 : i32
    %c0_i32_1 = arith.constant 0 : i32
    return %c0_i32, %c0_i32_0 : i32, i32
  }
  func.func @transform_4(%arg0: i32) -> (i32, i32) {
    %c0_i32 = arith.constant 0 : i32
    %c0_i32_0 = arith.constant 0 : i32
    %c0_i32_1 = arith.constant 0 : i32
    return %c0_i32, %c0_i32_0 : i32, i32
  }
  func.func @transform_5(%arg0: i32) -> (i32, i32) {
    %c0_i32 = arith.constant 0 : i32
    %c0_i32_0 = arith.constant 0 : i32
    %c0_i32_1 = arith.constant 0 : i32
    return %c0_i32, %c0_i32_0 : i32, i32
  }
  func.func @transform_6(%arg0: i32) -> (i32, i32) {
    %c0_i32 = arith.constant 0 : i32
    %c0_i32_0 = arith.constant 0 : i32
    %c0_i32_1 = arith.constant 0 : i32
    return %c0_i32, %c0_i32_0 : i32, i32
  }
  func.func @transform_7(%arg0: i32) -> (i32, i32) {
    %c0_i32 = arith.constant 0 : i32
    %c0_i32_0 = arith.constant 0 : i32
    return %arg0, %c0_i32 : i32, i32
  }
}

</mosaic_0001>

<llo_original>
// kernel: tpu_custom_call.1
$region0: #{tpu_custom_call.1}
  #allocation0 [shape = 'u32[]', space=smem, size = 0x4, offset = 0x4, fixed_abs, tag = 'smem constant byte address 0x4 - core index']
  #allocation1 [shape = 'u32[72,128]{1,0:T(1,128)}', space=vmem, size = 0x9000, scoped, tag = 'internal scratch']
  %s0 = inlined_call_operand.hbm [shape: f32[8,16], index: 0, kind: input, shape index: {}]
  %s1 = inlined_call_operand.hbm [shape: bf16[16,128], index: 1, kind: input, shape index: {}]
  %s2 = inlined_call_operand.vmem [shape: f32[1,128], index: 2, kind: input, shape index: {}]
  %s3 = inlined_call_operand.hbm [shape: bf16[128,128], index: 3, kind: input, shape index: {}]
  %s4 = inlined_call_operand.vmem [shape: f32[1,128], index: 4, kind: input, shape index: {}]
  %s5 = inlined_call_operand.hbm [shape: bf16[128,128], index: 5, kind: input, shape index: {}]
  %s6 = inlined_call_operand.vmem [shape: f32[1,128], index: 6, kind: input, shape index: {}]
  %s7 = inlined_call_operand.hbm [shape: f32[8,8], index: 7, kind: output, shape index: {}]
  %s8 = sld [smem:[#allocation0]]
  $region54: #{tpu_custom_call.1} parent=0
    _
  %s10 = ssub.s32 1, %s8
  %s11 = scalar_select 0, %s10, %s8
  $region1: #{tpu_custom_call.1} parent=0
    #allocation2 [shape = 'u8[4096]{0}', space=vmem, size = 0x1000, scoped, tag = 'input window, operand 0, single buffered']
    #allocation3 [shape = 's32[1]{0}', space=sflag, size = 0x4, scoped, tag = 'scoped memory for tpu_custom_call.1']
    #allocation4 [shape = 's32[1]{0}', space=sflag, size = 0x4, scoped, tag = 'scoped memory for tpu_custom_call.1']
    #allocation5 [shape = 'u8[4096]{0}', space=vmem, size = 0x1000, scoped, tag = 'input window, operand 1, single buffered']
    #allocation6 [shape = 's32[1]{0}', space=sflag, size = 0x4, scoped, tag = 'scoped memory for tpu_custom_call.1']
    #allocation7 [shape = 'u8[32768]{0}', space=vmem, size = 0x8000, scoped, tag = 'input window, operand 3, single buffered']
    #allocation8 [shape = 'u8[32768]{0}', space=vmem, size = 0x8000, scoped, tag = 'input window, operand 5, single buffered']
    #allocation9 [shape = 's32[1]{0}', space=sflag, size = 0x4, scoped, tag = 'scoped memory for tpu_custom_call.1']
    #allocation10 [shape = 'u8[4096]{0}', space=vmem, size = 0x1000, scoped, tag = 'output window, operand 0, single buffered']
    %12 = vsyncpa [#allocation3], 0
    %13 = vsyncpa [#allocation6], 0
    %14 = vsyncpa [#allocation9], 0
    %15 = vsyncpa [#allocation4], 0
    // Predicated region
    $region2: #{tpu_custom_call.1} parent=1 // pred_check
      _
    $region3: #{tpu_custom_call.1} parent=1 // pred_check_branch
      %17 = sbr.rel (0) target = $region5
    $region4: #{tpu_custom_call.1} parent=1 // pred_region
      %19 = vsyncadd [#allocation3], 0
      %s21 = sshll.u32 %s0, 4
      %s22 = int_to_ptr.hbm [resolvable:$true] %s21
      %s23 = sshll.u32 [#allocation2], 4
      %s24 = int_to_ptr.vmem [resolvable:$true] %s23
      %26 = dma.hbm_to_vmem [thread:$0]  %s22, 128, %s24, [#allocation3]
    $region5: #{tpu_custom_call.1} parent=1 // pred_fallthru
      _
    // Predicated region
    $region6: #{tpu_custom_call.1} parent=1 // pred_check
      _
    $region7: #{tpu_custom_call.1} parent=1 // pred_check_branch
      %28 = sbr.rel (0) target = $region9
    $region8: #{tpu_custom_call.1} parent=1 // pred_region
      %30 = vsyncadd [#allocation6], 0
      %s31 = sshll.u32 %s1, 4
      %s32 = int_to_ptr.hbm [resolvable:$true] %s31
      %s33 = sshll.u32 [#allocation5], 4
      %s34 = int_to_ptr.vmem [resolvable:$true] %s33
      %39 = dma.hbm_to_vmem [thread:$0]  %s32, 128, %s34, [#allocation6], 64, 64, 4
    $region9: #{tpu_custom_call.1} parent=1 // pred_fallthru
      _
    // Predicated region
    $region10: #{tpu_custom_call.1} parent=1 // pred_check
      _
    $region11: #{tpu_custom_call.1} parent=1 // pred_check_branch
      %41 = sbr.rel (0) target = $region13
    $region12: #{tpu_custom_call.1} parent=1 // pred_region
      _
    $region13: #{tpu_custom_call.1} parent=1 // pred_fallthru
      _
    // Predicated region
    $region14: #{tpu_custom_call.1} parent=1 // pred_check
      _
    $region15: #{tpu_custom_call.1} parent=1 // pred_check_branch
      %43 = sbr.rel (0) target = $region17
    $region16: #{tpu_custom_call.1} parent=1 // pred_region
      %45 = vsyncadd [#allocation6], 0
      %s46 = sshll.u32 %s3, 4
      %s47 = int_to_ptr.hbm [resolvable:$true] %s46
      %s48 = sshll.u32 [#allocation7], 4
      %s49 = int_to_ptr.vmem [resolvable:$true] %s48
      %54 = dma.hbm_to_vmem [thread:$0]  %s47, 1024, %s49, [#allocation6], 64, 64, 4
    $region17: #{tpu_custom_call.1} parent=1 // pred_fallthru
      _
    // Predicated region
    $region18: #{tpu_custom_call.1} parent=1 // pred_check
      _
    $region19: #{tpu_custom_call.1} parent=1 // pred_check_branch
      %56 = sbr.rel (0) target = $region21
    $region20: #{tpu_custom_call.1} parent=1 // pred_region
      _
    $region21: #{tpu_custom_call.1} parent=1 // pred_fallthru
      _
    // Predicated region
    $region22: #{tpu_custom_call.1} parent=1 // pred_check
      _
    $region23: #{tpu_custom_call.1} parent=1 // pred_check_branch
      %58 = sbr.rel (0) target = $region25
    $region24: #{tpu_custom_call.1} parent=1 // pred_region
      %60 = vsyncadd [#allocation9], 0
      %s61 = sshll.u32 %s5, 4
      %s62 = int_to_ptr.hbm [resolvable:$true] %s61
      %s63 = sshll.u32 [#allocation8], 4
      %s64 = int_to_ptr.vmem [resolvable:$true] %s63
      %69 = dma.hbm_to_vmem [thread:$0]  %s62, 1024, %s64, [#allocation9], 64, 64, 4
    $region25: #{tpu_custom_call.1} parent=1 // pred_fallthru
      _
    // Predicated region
    $region26: #{tpu_custom_call.1} parent=1 // pred_check
      _
    $region27: #{tpu_custom_call.1} parent=1 // pred_check_branch
      %71 = sbr.rel (0) target = $region29
    $region28: #{tpu_custom_call.1} parent=1 // pred_region
      _
    $region29: #{tpu_custom_call.1} parent=1 // pred_fallthru
      _
    // Predicated region
    $region30: #{tpu_custom_call.1} parent=1 // pred_check
      _
    $region31: #{tpu_custom_call.1} parent=1 // pred_check_branch
      %73 = sbr.rel (0) target = $region33
    $region32: #{tpu_custom_call.1} parent=1 // pred_region
      %75 = dma.done [#allocation3], 128
    $region33: #{tpu_custom_call.1} parent=1 // pred_fallthru
      _
    // Predicated region
    $region34: #{tpu_custom_call.1} parent=1 // pred_check
      _
    $region35: #{tpu_custom_call.1} parent=1 // pred_check_branch
      %77 = sbr.rel (0) target = $region37
    $region36: #{tpu_custom_call.1} parent=1 // pred_region
      %79 = dma.done [#allocation6], 128
    $region37: #{tpu_custom_call.1} parent=1 // pred_fallthru
      _
    // Predicated region
    $region38: #{tpu_custom_call.1} parent=1 // pred_check
      _
    $region39: #{tpu_custom_call.1} parent=1 // pred_check_branch
      %81 = sbr.rel (0) target = $region41
    $region40: #{tpu_custom_call.1} parent=1 // pred_region
      %83 = dma.done [#allocation6], 1024
    $region41: #{tpu_custom_call.1} parent=1 // pred_fallthru
      _
    // Predicated region
    $region42: #{tpu_custom_call.1} parent=1 // pred_check
      _
    $region43: #{tpu_custom_call.1} parent=1 // pred_check_branch
      %85 = sbr.rel (0) target = $region45
    $region44: #{tpu_custom_call.1} parent=1 // pred_region
      %87 = dma.done [#allocation9], 1024
    $region45: #{tpu_custom_call.1} parent=1 // pred_fallthru
      _
    %v89 = vld [vmem:[#allocation2] sm:$0xff]
    %v90 = vpack.c.bf16 %v89, %v89
    %v91 = vld [vmem:[#allocation5] sm:$0xf]
    %v92 = vld [vmem:[#allocation5 + $0x4] sm:$0xf]
    %v93 = vld [vmem:[%s2] sm:$0x1]
    %v95 = vperm.slane %v93, 0
    %v99 = vunpack.c.l.b16 %v91
    %v100 = vunpack.c.l.b16 %v92
    %v101 = vpack.c.b16 %v100, %v99
    %vm103 = vcmask 130048
    %v105 = vsel %vm103, %v90, 0
    %107 = vmatpush.bf16.msra.mxu0 0
    %108 = vmatpush.bf16.msra.mxu0 0
    %109 = vmatpush.bf16.msra.mxu0 0
    %110 = vmatpush.bf16.msra.mxu0 0
    %111 = vmatpush.bf16.msra.mxu0 0
    %112 = vmatpush.bf16.msra.mxu0 0
    %113 = vmatpush.bf16.msra.mxu0 0
    %114 = vmatpush.bf16.msra.mxu0 %v101
    %115 = vmatmul.bf16.gmra.mxu0 %v105
    %v116 = vpop.f32.mrf.mxu0
    %v117 = vadd.f32 %v95, %v116
    %v118 = vpop.f32.mrf.mxu0
    %119 = vdwg.mxu0
    %vm120 = vcmp.ge.f32.partialorder %v117, 0.0
    %v121 = vmul.f32 %v117, 0.2
    %v122 = vsel %vm120, %v117, %v121
    %v123 = vpack.c.bf16 %v122, %v122
    %v124 = vld [vmem:[#allocation7] sm:$0xf]
    %v125 = vld [vmem:[#allocation7 + $0x4] sm:$0xf]
    %v126 = vld [vmem:[#allocation7 + $0x8] sm:$0xf]
    %v127 = vld [vmem:[#allocation7 + $0xc] sm:$0xf]
    %v128 = vld [vmem:[#allocation7 + $0x10] sm:$0xf]
    %v129 = vld [vmem:[#allocation7 + $0x14] sm:$0xf]
    %v130 = vld [vmem:[#allocation7 + $0x18] sm:$0xf]
    %v131 = vld [vmem:[#allocation7 + $0x1c] sm:$0xf]
    %v132 = vld [vmem:[#allocation7 + $0x20] sm:$0xf]
    %v133 = vld [vmem:[#allocation7 + $0x24] sm:$0xf]
    %v134 = vld [vmem:[#allocation7 + $0x28] sm:$0xf]
    %v135 = vld [vmem:[#allocation7 + $0x2c] sm:$0xf]
    %v136 = vld [vmem:[#allocation7 + $0x30] sm:$0xf]
    %v137 = vld [vmem:[#allocation7 + $0x34] sm:$0xf]
    %v138 = vld [vmem:[#allocation7 + $0x38] sm:$0xf]
    %v139 = vld [vmem:[#allocation7 + $0x3c] sm:$0xf]
    %v140 = vld [vmem:[%s4] sm:$0x1]
    %v142 = vperm.slane %v140, 0
    %v160 = vunpack.c.l.b16 %v124
    %v161 = vunpack.c.l.b16 %v125
    %v162 = vunpack.c.l.b16 %v126
    %v163 = vunpack.c.l.b16 %v127
    %v164 = vunpack.c.l.b16 %v128
    %v165 = vunpack.c.l.b16 %v129
    %v166 = vunpack.c.l.b16 %v130
    %v167 = vunpack.c.l.b16 %v131
    %v168 = vunpack.c.l.b16 %v132
    %v169 = vunpack.c.l.b16 %v133
    %v170 = vunpack.c.l.b16 %v134
    %v171 = vunpack.c.l.b16 %v135
    %v172 = vunpack.c.l.b16 %v136
    %v173 = vunpack.c.l.b16 %v137
    %v174 = vunpack.c.l.b16 %v138
    %v175 = vunpack.c.l.b16 %v139
    %v176 = vpack.c.b16 %v161, %v160
    %v177 = vpack.c.b16 %v163, %v162
    %v178 = vpack.c.b16 %v165, %v164
    %v179 = vpack.c.b16 %v167, %v166
    %v180 = vpack.c.b16 %v169, %v168
    %v181 = vpack.c.b16 %v171, %v170
    %v182 = vpack.c.b16 %v173, %v172
    %v183 = vpack.c.b16 %v175, %v174
    %192 = vmatpush.bf16.msra.mxu0 %v183
    %193 = vmatpush.bf16.msra.mxu0 %v182
    %194 = vmatpush.bf16.msra.mxu0 %v181
    %195 = vmatpush.bf16.msra.mxu0 %v180
    %196 = vmatpush.bf16.msra.mxu0 %v179
    %197 = vmatpush.bf16.msra.mxu0 %v178
    %198 = vmatpush.bf16.msra.mxu0 %v177
    %199 = vmatpush.bf16.msra.mxu0 %v176
    %200 = vmatmul.bf16.gmra.mxu0 %v123
    %v201 = vpop.f32.mrf.mxu0
    %v202 = vadd.f32 %v142, %v201
    %v203 = vpop.f32.mrf.mxu0
    %204 = vdwg.mxu0
    %vm205 = vcmp.ge.f32.partialorder %v202, 0.0
    %v206 = vmul.f32 %v202, 0.2
    %v207 = vsel %vm205, %v202, %v206
    %v208 = vpack.c.bf16 %v207, %v207
    %v209 = vld [vmem:[#allocation8] sm:$0xf]
    %v210 = vld [vmem:[#allocation8 + $0x4] sm:$0xf]
    %v211 = vld [vmem:[#allocation8 + $0x8] sm:$0xf]
    %v212 = vld [vmem:[#allocation8 + $0xc] sm:$0xf]
    %v213 = vld [vmem:[#allocation8 + $0x10] sm:$0xf]
    %v214 = vld [vmem:[#allocation8 + $0x14] sm:$0xf]
    %v215 = vld [vmem:[#allocation8 + $0x18] sm:$0xf]
    %v216 = vld [vmem:[#allocation8 + $0x1c] sm:$0xf]
    %v217 = vld [vmem:[#allocation8 + $0x20] sm:$0xf]
    %v218 = vld [vmem:[#allocation8 + $0x24] sm:$0xf]
    %v219 = vld [vmem:[#allocation8 + $0x28] sm:$0xf]
    %v220 = vld [vmem:[#allocation8 + $0x2c] sm:$0xf]
    %v221 = vld [vmem:[#allocation8 + $0x30] sm:$0xf]
    %v222 = vld [vmem:[#allocation8 + $0x34] sm:$0xf]
    %v223 = vld [vmem:[#allocation8 + $0x38] sm:$0xf]
    %v224 = vld [vmem:[#allocation8 + $0x3c] sm:$0xf]
    %v225 = vld [vmem:[%s6] sm:$0x1]
    %v227 = vperm.slane %v225, 0
    %v245 = vunpack.c.l.b16 %v209
    %v246 = vunpack.c.l.b16 %v210
    %v247 = vunpack.c.l.b16 %v211
    %v248 = vunpack.c.l.b16 %v212
    %v249 = vunpack.c.l.b16 %v213
    %v250 = vunpack.c.l.b16 %v214
    %v251 = vunpack.c.l.b16 %v215
    %v252 = vunpack.c.l.b16 %v216
    %v253 = vunpack.c.l.b16 %v217
    %v254 = vunpack.c.l.b16 %v218
    %v255 = vunpack.c.l.b16 %v219
    %v256 = vunpack.c.l.b16 %v220
    %v257 = vunpack.c.l.b16 %v221
    %v258 = vunpack.c.l.b16 %v222
    %v259 = vunpack.c.l.b16 %v223
    %v260 = vunpack.c.l.b16 %v224
    %v261 = vpack.c.b16 %v246, %v245
    %v262 = vpack.c.b16 %v248, %v247
    %v263 = vpack.c.b16 %v250, %v249
    %v264 = vpack.c.b16 %v252, %v251
    %v265 = vpack.c.b16 %v254, %v253
    %v266 = vpack.c.b16 %v256, %v255
    %v267 = vpack.c.b16 %v258, %v257
    %v268 = vpack.c.b16 %v260, %v259
    %277 = vmatpush.bf16.msra.mxu0 %v268
    %278 = vmatpush.bf16.msra.mxu0 %v267
    %279 = vmatpush.bf16.msra.mxu0 %v266
    %280 = vmatpush.bf16.msra.mxu0 %v265
    %281 = vmatpush.bf16.msra.mxu0 %v264
    %282 = vmatpush.bf16.msra.mxu0 %v263
    %283 = vmatpush.bf16.msra.mxu0 %v262
    %284 = vmatpush.bf16.msra.mxu0 %v261
    %285 = vmatmul.bf16.gmra.mxu0 %v208
    %v286 = vpop.f32.mrf.mxu0
    %v287 = vadd.f32 %v227, %v286
    %v288 = vpop.f32.mrf.mxu0
    %289 = vdwg.mxu0
    %vm290 = vcmask 64512
    %291 = vst.msk [vmem:[#allocation10] sm:$0xff] %vm290, %v287
    // Predicated region
    $region46: #{tpu_custom_call.1} parent=1 // pred_check
      _
    $region47: #{tpu_custom_call.1} parent=1 // pred_check_branch
      %293 = sbr.rel (0) target = $region49
    $region48: #{tpu_custom_call.1} parent=1 // pred_region
      %295 = vsyncadd [#allocation4], 0
      %s297 = sshll.u32 [#allocation10], 4
      %s298 = int_to_ptr.vmem [resolvable:$true] %s297
      %s299 = sshll.u32 %s7, 4
      %s300 = int_to_ptr.hbm [resolvable:$true] %s299
      %302 = dma.vmem_to_hbm [thread:$0]  %s298, 128, %s300, [#allocation4]
    $region49: #{tpu_custom_call.1} parent=1 // pred_fallthru
      _
    // Predicated region
    $region50: #{tpu_custom_call.1} parent=1 // pred_check
      _
    $region51: #{tpu_custom_call.1} parent=1 // pred_check_branch
      %304 = sbr.rel (0) target = $region53
    $region52: #{tpu_custom_call.1} parent=1 // pred_region
      %306 = dma.done [#allocation4], 128
    $region53: #{tpu_custom_call.1} parent=1 // pred_fallthru
      _
    %307 = vsyncpa [#allocation3], 1
    %308 = vsyncpa [#allocation6], 1
    %309 = vsyncpa [#allocation9], 1
    %310 = vsyncpa [#allocation4], 1

</llo_original>
